<compile_context>
chip_gen: v6e
topology: v6e:2x2x1
jax: 0.10.0
libtpu: 0.0.40
codegen_flags: <defaults>
</compile_context>

<pallas_src>
import jax
import jax.numpy as jnp
from jax.experimental import pallas as pl
from jax.experimental.pallas import tpu as pltpu


# ---------------------------------------------------------------------------
# Packed parameter layout (single flat f32 vector, lives in SMEM).
# PyTorch nn.Linear(in, out) stores weight as (out, in); we keep that layout
# because the transposed (features, batch) compute needs W[j, k] with
# j = output feature, k = input feature.
# ---------------------------------------------------------------------------
_D_IN, _D_H1, _D_H2, _D_OUT = 8, 6, 4, 1

_W1_OFF = 0
_B1_OFF = _W1_OFF + _D_H1 * _D_IN          # 48
_W2_OFF = _B1_OFF + _D_H1                  # 54
_B2_OFF = _W2_OFF + _D_H2 * _D_H1          # 78
_W3_OFF = _B2_OFF + _D_H2                  # 82
_B3_OFF = _W3_OFF + _D_OUT * _D_H2         # 86
_P_SIZE = _B3_OFF + _D_OUT                 # 87


def _round_up(n, m):
    return ((n + m - 1) // m) * m


def mlp_kernel(p_ref, x_ref, o_ref):
    """3-layer MLP on one (features, batch_tile) activation block.

    p_ref: (_P_SIZE,) packed params in SMEM (cheap scalar reads).
    x_ref: (8, TB) input activations, batch on the lane axis.
    o_ref: (1, TB) output row (lane-dense store).
    """

    def sigmoid(z):
        # sigmoid(z) == 0.5 * tanh(0.5 * z) + 0.5 : one EUP op, no divide.
        return 0.5 * jnp.tanh(0.5 * z) + 0.5

    def dense_sigmoid(rows_in, w_off, b_off, n_out, n_in):
        # out[j, :] = sigmoid(b[j] + sum_k W[j, k] * in[k, :])
        outs = []
        for j in range(n_out):
            acc = p_ref[b_off + j] + p_ref[w_off + j * n_in] * rows_in[0]
            for k in range(1, n_in):
                acc = acc + p_ref[w_off + j * n_in + k] * rows_in[k]
            outs.append(sigmoid(acc))
        return outs

    x_rows = [x_ref[k:k + 1, :] for k in range(_D_IN)]       # 8 x (1, TB)
    h1 = dense_sigmoid(x_rows, _W1_OFF, _B1_OFF, _D_H1, _D_IN)
    h2 = dense_sigmoid(h1, _W2_OFF, _B2_OFF, _D_H2, _D_H1)
    h3 = dense_sigmoid(h2, _W3_OFF, _B3_OFF, _D_OUT, _D_H2)
    o_ref[...] = h3[0]


def mlp_forward(x, params):
    """Equivalent of the PyTorch Model.forward for x of shape (B, 8)."""
    w1, b1, w2, b2, w3, b3 = params
    B = x.shape[0]

    # One packed parameter slab -> a single tiny transfer instead of 7 DMAs.
    p = jnp.concatenate([
        w1.reshape(-1), b1.reshape(-1),
        w2.reshape(-1), b2.reshape(-1),
        w3.reshape(-1), b3.reshape(-1),
    ]).astype(jnp.float32)

    # Put the batch dimension on the lane axis and pad it to a lane-dense
    # tile multiple (padded columns are zeros and sliced off afterwards).
    xt = x.astype(jnp.float32).T                               # (8, B)
    if B <= 512:
        tb = _round_up(max(B, 1), 128)                         # single block
    else:
        tb = 512
    bp = _round_up(B, tb)
    if bp != B:
        xt = jnp.pad(xt, ((0, 0), (0, bp - B)))

    grid = (bp // tb,)

    out = pl.pallas_call(
        mlp_kernel,
        out_shape=jax.ShapeDtypeStruct((1, bp), jnp.float32),
        grid=grid,
        in_specs=[
            pl.BlockSpec(memory_space=pltpu.MemorySpace.SMEM),   # packed params
            pl.BlockSpec((_D_IN, tb), lambda i: (0, i)),         # x batch tile
        ],
        out_specs=pl.BlockSpec((1, tb), lambda i: (0, i)),
        compiler_params=pltpu.CompilerParams(
            dimension_semantics=("parallel",)),
        cost_estimate=pl.CostEstimate(
            flops=2 * B * (_D_H1 * _D_IN + _D_H2 * _D_H1 + _D_OUT * _D_H2),
            transcendentals=B * (_D_H1 + _D_H2 + _D_OUT),
            bytes_accessed=B * (_D_IN + _D_OUT) * 4 + _P_SIZE * 4),
    )(p, xt)

    return out[0, :B].reshape(B, 1)


def init_params(key):
    """Deterministic init matching PyTorch nn.Linear defaults & layouts.

    Weights are (out_features, in_features), biases are (out_features,),
    both drawn uniform(-1/sqrt(fan_in), 1/sqrt(fan_in)).
    """
    ks = jax.random.split(key, 6)

    def uniform(k, shape, fan_in):
        bound = 1.0 / jnp.sqrt(fan_in)
        return jax.random.uniform(k, shape, jnp.float32, -bound, bound)

    w1 = uniform(ks[0], (_D_H1, _D_IN), 8.0)
    b1 = uniform(ks[1], (_D_H1,), 8.0)
    w2 = uniform(ks[2], (_D_H2, _D_H1), 6.0)
    b2 = uniform(ks[3], (_D_H2,), 6.0)
    w3 = uniform(ks[4], (_D_OUT, _D_H2), 4.0)
    b3 = uniform(ks[5], (_D_OUT,), 4.0)
    return (w1, b1, w2, b2, w3, b3)


def reference_forward(x, params):
    w1, b1, w2, b2, w3, b3 = params
    h = jax.nn.sigmoid(x @ w1.T + b1)
    h = jax.nn.sigmoid(h @ w2.T + b2)
    return jax.nn.sigmoid(h @ w3.T + b3)


if __name__ == "__main__":
    key = jax.random.PRNGKey(0)
    pkey, xkey, xkey2 = jax.random.split(key, 3)

    params = init_params(pkey)

    # Small single-block case.
    batch = 16
    x = jax.random.normal(xkey, (batch, _D_IN), dtype=jnp.float32)
    out = jax.block_until_ready(mlp_forward(x, params))
    ref = reference_forward(x, params)
    assert out.shape == (batch, 1), out.shape
    assert jnp.allclose(out, ref, atol=1e-5, rtol=1e-5), "mismatch vs reference"

    # Multi-block (tiled + padded batch) case to exercise the pipelined grid.
    batch2 = 600
    x2 = jax.random.normal(xkey2, (batch2, _D_IN), dtype=jnp.float32)
    out2 = jax.block_until_ready(mlp_forward(x2, params))
    ref2 = reference_forward(x2, params)
    assert out2.shape == (batch2, 1), out2.shape
    assert jnp.allclose(out2, ref2, atol=1e-5, rtol=1e-5), "mismatch vs reference (tiled)"

    print("KERNEL_OK")
</pallas_src>

<mosaic_0001>
module attributes {stable_mosaic.version = 11 : i64} {
  func.func @mlp_kernel(%arg0: i32, %arg1: memref<87xf32, #tpu.memory_space<smem>>, %arg2: memref<8x128xf32, #tpu.memory_space<vmem>>, %arg3: memref<1x128xf32, #tpu.memory_space<vmem>>) attributes {dimension_semantics = [#tpu.dimension_semantics<parallel>], iteration_bounds = array<i64: 1>, scalar_prefetch = 0 : i64, scratch_operands = 0 : i64, tpu.core_type = #tpu.core_type<tc>, window_params = [{transform_indices = @transform_0, window_bounds = array<i64: 87>}, {transform_indices = @transform_1, window_bounds = array<i64: 8, 128>}, {transform_indices = @transform_2, window_bounds = array<i64: 1, 128>}]} {
    %c0 = arith.constant 0 : index
    %c0_0 = arith.constant 0 : index
    %0 = vector.load %arg2[%c0, %c0_0] : memref<8x128xf32, #tpu.memory_space<vmem>>, vector<1x128xf32>
    %c1 = arith.constant 1 : index
    %c0_1 = arith.constant 0 : index
    %1 = vector.load %arg2[%c1, %c0_1] : memref<8x128xf32, #tpu.memory_space<vmem>>, vector<1x128xf32>
    %c2 = arith.constant 2 : index
    %c0_2 = arith.constant 0 : index
    %2 = vector.load %arg2[%c2, %c0_2] : memref<8x128xf32, #tpu.memory_space<vmem>>, vector<1x128xf32>
    %c3 = arith.constant 3 : index
    %c0_3 = arith.constant 0 : index
    %3 = vector.load %arg2[%c3, %c0_3] : memref<8x128xf32, #tpu.memory_space<vmem>>, vector<1x128xf32>
    %c4 = arith.constant 4 : index
    %c0_4 = arith.constant 0 : index
    %4 = vector.load %arg2[%c4, %c0_4] : memref<8x128xf32, #tpu.memory_space<vmem>>, vector<1x128xf32>
    %c5 = arith.constant 5 : index
    %c0_5 = arith.constant 0 : index
    %5 = vector.load %arg2[%c5, %c0_5] : memref<8x128xf32, #tpu.memory_space<vmem>>, vector<1x128xf32>
    %c6 = arith.constant 6 : index
    %c0_6 = arith.constant 0 : index
    %6 = vector.load %arg2[%c6, %c0_6] : memref<8x128xf32, #tpu.memory_space<vmem>>, vector<1x128xf32>
    %c7 = arith.constant 7 : index
    %c0_7 = arith.constant 0 : index
    %7 = vector.load %arg2[%c7, %c0_7] : memref<8x128xf32, #tpu.memory_space<vmem>>, vector<1x128xf32>
    %c48 = arith.constant 48 : index
    %8 = memref.load %arg1[%c48] : memref<87xf32, #tpu.memory_space<smem>>
    %c0_8 = arith.constant 0 : index
    %9 = memref.load %arg1[%c0_8] : memref<87xf32, #tpu.memory_space<smem>>
    %10 = vector.broadcast %9 : f32 to vector<1x128xf32>
    %11 = arith.mulf %10, %0 : vector<1x128xf32>
    %12 = vector.broadcast %8 : f32 to vector<1x128xf32>
    %13 = arith.addf %12, %11 : vector<1x128xf32>
    %c1_9 = arith.constant 1 : index
    %14 = memref.load %arg1[%c1_9] : memref<87xf32, #tpu.memory_space<smem>>
    %15 = vector.broadcast %14 : f32 to vector<1x128xf32>
    %16 = arith.mulf %15, %1 : vector<1x128xf32>
    %17 = arith.addf %13, %16 : vector<1x128xf32>
    %c2_10 = arith.constant 2 : index
    %18 = memref.load %arg1[%c2_10] : memref<87xf32, #tpu.memory_space<smem>>
    %19 = vector.broadcast %18 : f32 to vector<1x128xf32>
    %20 = arith.mulf %19, %2 : vector<1x128xf32>
    %21 = arith.addf %17, %20 : vector<1x128xf32>
    %c3_11 = arith.constant 3 : index
    %22 = memref.load %arg1[%c3_11] : memref<87xf32, #tpu.memory_space<smem>>
    %23 = vector.broadcast %22 : f32 to vector<1x128xf32>
    %24 = arith.mulf %23, %3 : vector<1x128xf32>
    %25 = arith.addf %21, %24 : vector<1x128xf32>
    %c4_12 = arith.constant 4 : index
    %26 = memref.load %arg1[%c4_12] : memref<87xf32, #tpu.memory_space<smem>>
    %27 = vector.broadcast %26 : f32 to vector<1x128xf32>
    %28 = arith.mulf %27, %4 : vector<1x128xf32>
    %29 = arith.addf %25, %28 : vector<1x128xf32>
    %c5_13 = arith.constant 5 : index
    %30 = memref.load %arg1[%c5_13] : memref<87xf32, #tpu.memory_space<smem>>
    %31 = vector.broadcast %30 : f32 to vector<1x128xf32>
    %32 = arith.mulf %31, %5 : vector<1x128xf32>
    %33 = arith.addf %29, %32 : vector<1x128xf32>
    %c6_14 = arith.constant 6 : index
    %34 = memref.load %arg1[%c6_14] : memref<87xf32, #tpu.memory_space<smem>>
    %35 = vector.broadcast %34 : f32 to vector<1x128xf32>
    %36 = arith.mulf %35, %6 : vector<1x128xf32>
    %37 = arith.addf %33, %36 : vector<1x128xf32>
    %c7_15 = arith.constant 7 : index
    %38 = memref.load %arg1[%c7_15] : memref<87xf32, #tpu.memory_space<smem>>
    %39 = vector.broadcast %38 : f32 to vector<1x128xf32>
    %40 = arith.mulf %39, %7 : vector<1x128xf32>
    %41 = arith.addf %37, %40 : vector<1x128xf32>
    %cst = arith.constant 5.000000e-01 : f32
    %42 = vector.broadcast %cst : f32 to vector<1x128xf32>
    %43 = arith.mulf %42, %41 : vector<1x128xf32>
    %44 = math.tanh %43 : vector<1x128xf32>
    %cst_16 = arith.constant 5.000000e-01 : f32
    %45 = vector.broadcast %cst_16 : f32 to vector<1x128xf32>
    %46 = arith.mulf %45, %44 : vector<1x128xf32>
    %cst_17 = arith.constant 5.000000e-01 : f32
    %47 = vector.broadcast %cst_17 : f32 to vector<1x128xf32>
    %48 = arith.addf %46, %47 : vector<1x128xf32>
    %c49 = arith.constant 49 : index
    %49 = memref.load %arg1[%c49] : memref<87xf32, #tpu.memory_space<smem>>
    %c8 = arith.constant 8 : index
    %50 = memref.load %arg1[%c8] : memref<87xf32, #tpu.memory_space<smem>>
    %51 = vector.broadcast %50 : f32 to vector<1x128xf32>
    %52 = arith.mulf %51, %0 : vector<1x128xf32>
    %53 = vector.broadcast %49 : f32 to vector<1x128xf32>
    %54 = arith.addf %53, %52 : vector<1x128xf32>
    %c9 = arith.constant 9 : index
    %55 = memref.load %arg1[%c9] : memref<87xf32, #tpu.memory_space<smem>>
    %56 = vector.broadcast %55 : f32 to vector<1x128xf32>
    %57 = arith.mulf %56, %1 : vector<1x128xf32>
    %58 = arith.addf %54, %57 : vector<1x128xf32>
    %c10 = arith.constant 10 : index
    %59 = memref.load %arg1[%c10] : memref<87xf32, #tpu.memory_space<smem>>
    %60 = vector.broadcast %59 : f32 to vector<1x128xf32>
    %61 = arith.mulf %60, %2 : vector<1x128xf32>
    %62 = arith.addf %58, %61 : vector<1x128xf32>
    %c11 = arith.constant 11 : index
    %63 = memref.load %arg1[%c11] : memref<87xf32, #tpu.memory_space<smem>>
    %64 = vector.broadcast %63 : f32 to vector<1x128xf32>
    %65 = arith.mulf %64, %3 : vector<1x128xf32>
    %66 = arith.addf %62, %65 : vector<1x128xf32>
    %c12 = arith.constant 12 : index
    %67 = memref.load %arg1[%c12] : memref<87xf32, #tpu.memory_space<smem>>
    %68 = vector.broadcast %67 : f32 to vector<1x128xf32>
    %69 = arith.mulf %68, %4 : vector<1x128xf32>
    %70 = arith.addf %66, %69 : vector<1x128xf32>
    %c13 = arith.constant 13 : index
    %71 = memref.load %arg1[%c13] : memref<87xf32, #tpu.memory_space<smem>>
    %72 = vector.broadcast %71 : f32 to vector<1x128xf32>
    %73 = arith.mulf %72, %5 : vector<1x128xf32>
    %74 = arith.addf %70, %73 : vector<1x128xf32>
    %c14 = arith.constant 14 : index
    %75 = memref.load %arg1[%c14] : memref<87xf32, #tpu.memory_space<smem>>
    %76 = vector.broadcast %75 : f32 to vector<1x128xf32>
    %77 = arith.mulf %76, %6 : vector<1x128xf32>
    %78 = arith.addf %74, %77 : vector<1x128xf32>
    %c15 = arith.constant 15 : index
    %79 = memref.load %arg1[%c15] : memref<87xf32, #tpu.memory_space<smem>>
    %80 = vector.broadcast %79 : f32 to vector<1x128xf32>
    %81 = arith.mulf %80, %7 : vector<1x128xf32>
    %82 = arith.addf %78, %81 : vector<1x128xf32>
    %cst_18 = arith.constant 5.000000e-01 : f32
    %83 = vector.broadcast %cst_18 : f32 to vector<1x128xf32>
    %84 = arith.mulf %83, %82 : vector<1x128xf32>
    %85 = math.tanh %84 : vector<1x128xf32>
    %cst_19 = arith.constant 5.000000e-01 : f32
    %86 = vector.broadcast %cst_19 : f32 to vector<1x128xf32>
    %87 = arith.mulf %86, %85 : vector<1x128xf32>
    %cst_20 = arith.constant 5.000000e-01 : f32
    %88 = vector.broadcast %cst_20 : f32 to vector<1x128xf32>
    %89 = arith.addf %87, %88 : vector<1x128xf32>
    %c50 = arith.constant 50 : index
    %90 = memref.load %arg1[%c50] : memref<87xf32, #tpu.memory_space<smem>>
    %c16 = arith.constant 16 : index
    %91 = memref.load %arg1[%c16] : memref<87xf32, #tpu.memory_space<smem>>
    %92 = vector.broadcast %91 : f32 to vector<1x128xf32>
    %93 = arith.mulf %92, %0 : vector<1x128xf32>
    %94 = vector.broadcast %90 : f32 to vector<1x128xf32>
    %95 = arith.addf %94, %93 : vector<1x128xf32>
    %c17 = arith.constant 17 : index
    %96 = memref.load %arg1[%c17] : memref<87xf32, #tpu.memory_space<smem>>
    %97 = vector.broadcast %96 : f32 to vector<1x128xf32>
    %98 = arith.mulf %97, %1 : vector<1x128xf32>
    %99 = arith.addf %95, %98 : vector<1x128xf32>
    %c18 = arith.constant 18 : index
    %100 = memref.load %arg1[%c18] : memref<87xf32, #tpu.memory_space<smem>>
    %101 = vector.broadcast %100 : f32 to vector<1x128xf32>
    %102 = arith.mulf %101, %2 : vector<1x128xf32>
    %103 = arith.addf %99, %102 : vector<1x128xf32>
    %c19 = arith.constant 19 : index
    %104 = memref.load %arg1[%c19] : memref<87xf32, #tpu.memory_space<smem>>
    %105 = vector.broadcast %104 : f32 to vector<1x128xf32>
    %106 = arith.mulf %105, %3 : vector<1x128xf32>
    %107 = arith.addf %103, %106 : vector<1x128xf32>
    %c20 = arith.constant 20 : index
    %108 = memref.load %arg1[%c20] : memref<87xf32, #tpu.memory_space<smem>>
    %109 = vector.broadcast %108 : f32 to vector<1x128xf32>
    %110 = arith.mulf %109, %4 : vector<1x128xf32>
    %111 = arith.addf %107, %110 : vector<1x128xf32>
    %c21 = arith.constant 21 : index
    %112 = memref.load %arg1[%c21] : memref<87xf32, #tpu.memory_space<smem>>
    %113 = vector.broadcast %112 : f32 to vector<1x128xf32>
    %114 = arith.mulf %113, %5 : vector<1x128xf32>
    %115 = arith.addf %111, %114 : vector<1x128xf32>
    %c22 = arith.constant 22 : index
    %116 = memref.load %arg1[%c22] : memref<87xf32, #tpu.memory_space<smem>>
    %117 = vector.broadcast %116 : f32 to vector<1x128xf32>
    %118 = arith.mulf %117, %6 : vector<1x128xf32>
    %119 = arith.addf %115, %118 : vector<1x128xf32>
    %c23 = arith.constant 23 : index
    %120 = memref.load %arg1[%c23] : memref<87xf32, #tpu.memory_space<smem>>
    %121 = vector.broadcast %120 : f32 to vector<1x128xf32>
    %122 = arith.mulf %121, %7 : vector<1x128xf32>
    %123 = arith.addf %119, %122 : vector<1x128xf32>
    %cst_21 = arith.constant 5.000000e-01 : f32
    %124 = vector.broadcast %cst_21 : f32 to vector<1x128xf32>
    %125 = arith.mulf %124, %123 : vector<1x128xf32>
    %126 = math.tanh %125 : vector<1x128xf32>
    %cst_22 = arith.constant 5.000000e-01 : f32
    %127 = vector.broadcast %cst_22 : f32 to vector<1x128xf32>
    %128 = arith.mulf %127, %126 : vector<1x128xf32>
    %cst_23 = arith.constant 5.000000e-01 : f32
    %129 = vector.broadcast %cst_23 : f32 to vector<1x128xf32>
    %130 = arith.addf %128, %129 : vector<1x128xf32>
    %c51 = arith.constant 51 : index
    %131 = memref.load %arg1[%c51] : memref<87xf32, #tpu.memory_space<smem>>
    %c24 = arith.constant 24 : index
    %132 = memref.load %arg1[%c24] : memref<87xf32, #tpu.memory_space<smem>>
    %133 = vector.broadcast %132 : f32 to vector<1x128xf32>
    %134 = arith.mulf %133, %0 : vector<1x128xf32>
    %135 = vector.broadcast %131 : f32 to vector<1x128xf32>
    %136 = arith.addf %135, %134 : vector<1x128xf32>
    %c25 = arith.constant 25 : index
    %137 = memref.load %arg1[%c25] : memref<87xf32, #tpu.memory_space<smem>>
    %138 = vector.broadcast %137 : f32 to vector<1x128xf32>
    %139 = arith.mulf %138, %1 : vector<1x128xf32>
    %140 = arith.addf %136, %139 : vector<1x128xf32>
    %c26 = arith.constant 26 : index
    %141 = memref.load %arg1[%c26] : memref<87xf32, #tpu.memory_space<smem>>
    %142 = vector.broadcast %141 : f32 to vector<1x128xf32>
    %143 = arith.mulf %142, %2 : vector<1x128xf32>
    %144 = arith.addf %140, %143 : vector<1x128xf32>
    %c27 = arith.constant 27 : index
    %145 = memref.load %arg1[%c27] : memref<87xf32, #tpu.memory_space<smem>>
    %146 = vector.broadcast %145 : f32 to vector<1x128xf32>
    %147 = arith.mulf %146, %3 : vector<1x128xf32>
    %148 = arith.addf %144, %147 : vector<1x128xf32>
    %c28 = arith.constant 28 : index
    %149 = memref.load %arg1[%c28] : memref<87xf32, #tpu.memory_space<smem>>
    %150 = vector.broadcast %149 : f32 to vector<1x128xf32>
    %151 = arith.mulf %150, %4 : vector<1x128xf32>
    %152 = arith.addf %148, %151 : vector<1x128xf32>
    %c29 = arith.constant 29 : index
    %153 = memref.load %arg1[%c29] : memref<87xf32, #tpu.memory_space<smem>>
    %154 = vector.broadcast %153 : f32 to vector<1x128xf32>
    %155 = arith.mulf %154, %5 : vector<1x128xf32>
    %156 = arith.addf %152, %155 : vector<1x128xf32>
    %c30 = arith.constant 30 : index
    %157 = memref.load %arg1[%c30] : memref<87xf32, #tpu.memory_space<smem>>
    %158 = vector.broadcast %157 : f32 to vector<1x128xf32>
    %159 = arith.mulf %158, %6 : vector<1x128xf32>
    %160 = arith.addf %156, %159 : vector<1x128xf32>
    %c31 = arith.constant 31 : index
    %161 = memref.load %arg1[%c31] : memref<87xf32, #tpu.memory_space<smem>>
    %162 = vector.broadcast %161 : f32 to vector<1x128xf32>
    %163 = arith.mulf %162, %7 : vector<1x128xf32>
    %164 = arith.addf %160, %163 : vector<1x128xf32>
    %cst_24 = arith.constant 5.000000e-01 : f32
    %165 = vector.broadcast %cst_24 : f32 to vector<1x128xf32>
    %166 = arith.mulf %165, %164 : vector<1x128xf32>
    %167 = math.tanh %166 : vector<1x128xf32>
    %cst_25 = arith.constant 5.000000e-01 : f32
    %168 = vector.broadcast %cst_25 : f32 to vector<1x128xf32>
    %169 = arith.mulf %168, %167 : vector<1x128xf32>
    %cst_26 = arith.constant 5.000000e-01 : f32
    %170 = vector.broadcast %cst_26 : f32 to vector<1x128xf32>
    %171 = arith.addf %169, %170 : vector<1x128xf32>
    %c52 = arith.constant 52 : index
    %172 = memref.load %arg1[%c52] : memref<87xf32, #tpu.memory_space<smem>>
    %c32 = arith.constant 32 : index
    %173 = memref.load %arg1[%c32] : memref<87xf32, #tpu.memory_space<smem>>
    %174 = vector.broadcast %173 : f32 to vector<1x128xf32>
    %175 = arith.mulf %174, %0 : vector<1x128xf32>
    %176 = vector.broadcast %172 : f32 to vector<1x128xf32>
    %177 = arith.addf %176, %175 : vector<1x128xf32>
    %c33 = arith.constant 33 : index
    %178 = memref.load %arg1[%c33] : memref<87xf32, #tpu.memory_space<smem>>
    %179 = vector.broadcast %178 : f32 to vector<1x128xf32>
    %180 = arith.mulf %179, %1 : vector<1x128xf32>
    %181 = arith.addf %177, %180 : vector<1x128xf32>
    %c34 = arith.constant 34 : index
    %182 = memref.load %arg1[%c34] : memref<87xf32, #tpu.memory_space<smem>>
    %183 = vector.broadcast %182 : f32 to vector<1x128xf32>
    %184 = arith.mulf %183, %2 : vector<1x128xf32>
    %185 = arith.addf %181, %184 : vector<1x128xf32>
    %c35 = arith.constant 35 : index
    %186 = memref.load %arg1[%c35] : memref<87xf32, #tpu.memory_space<smem>>
    %187 = vector.broadcast %186 : f32 to vector<1x128xf32>
    %188 = arith.mulf %187, %3 : vector<1x128xf32>
    %189 = arith.addf %185, %188 : vector<1x128xf32>
    %c36 = arith.constant 36 : index
    %190 = memref.load %arg1[%c36] : memref<87xf32, #tpu.memory_space<smem>>
    %191 = vector.broadcast %190 : f32 to vector<1x128xf32>
    %192 = arith.mulf %191, %4 : vector<1x128xf32>
    %193 = arith.addf %189, %192 : vector<1x128xf32>
    %c37 = arith.constant 37 : index
    %194 = memref.load %arg1[%c37] : memref<87xf32, #tpu.memory_space<smem>>
    %195 = vector.broadcast %194 : f32 to vector<1x128xf32>
    %196 = arith.mulf %195, %5 : vector<1x128xf32>
    %197 = arith.addf %193, %196 : vector<1x128xf32>
    %c38 = arith.constant 38 : index
    %198 = memref.load %arg1[%c38] : memref<87xf32, #tpu.memory_space<smem>>
    %199 = vector.broadcast %198 : f32 to vector<1x128xf32>
    %200 = arith.mulf %199, %6 : vector<1x128xf32>
    %201 = arith.addf %197, %200 : vector<1x128xf32>
    %c39 = arith.constant 39 : index
    %202 = memref.load %arg1[%c39] : memref<87xf32, #tpu.memory_space<smem>>
    %203 = vector.broadcast %202 : f32 to vector<1x128xf32>
    %204 = arith.mulf %203, %7 : vector<1x128xf32>
    %205 = arith.addf %201, %204 : vector<1x128xf32>
    %cst_27 = arith.constant 5.000000e-01 : f32
    %206 = vector.broadcast %cst_27 : f32 to vector<1x128xf32>
    %207 = arith.mulf %206, %205 : vector<1x128xf32>
    %208 = math.tanh %207 : vector<1x128xf32>
    %cst_28 = arith.constant 5.000000e-01 : f32
    %209 = vector.broadcast %cst_28 : f32 to vector<1x128xf32>
    %210 = arith.mulf %209, %208 : vector<1x128xf32>
    %cst_29 = arith.constant 5.000000e-01 : f32
    %211 = vector.broadcast %cst_29 : f32 to vector<1x128xf32>
    %212 = arith.addf %210, %211 : vector<1x128xf32>
    %c53 = arith.constant 53 : index
    %213 = memref.load %arg1[%c53] : memref<87xf32, #tpu.memory_space<smem>>
    %c40 = arith.constant 40 : index
    %214 = memref.load %arg1[%c40] : memref<87xf32, #tpu.memory_space<smem>>
    %215 = vector.broadcast %214 : f32 to vector<1x128xf32>
    %216 = arith.mulf %215, %0 : vector<1x128xf32>
    %217 = vector.broadcast %213 : f32 to vector<1x128xf32>
    %218 = arith.addf %217, %216 : vector<1x128xf32>
    %c41 = arith.constant 41 : index
    %219 = memref.load %arg1[%c41] : memref<87xf32, #tpu.memory_space<smem>>
    %220 = vector.broadcast %219 : f32 to vector<1x128xf32>
    %221 = arith.mulf %220, %1 : vector<1x128xf32>
    %222 = arith.addf %218, %221 : vector<1x128xf32>
    %c42 = arith.constant 42 : index
    %223 = memref.load %arg1[%c42] : memref<87xf32, #tpu.memory_space<smem>>
    %224 = vector.broadcast %223 : f32 to vector<1x128xf32>
    %225 = arith.mulf %224, %2 : vector<1x128xf32>
    %226 = arith.addf %222, %225 : vector<1x128xf32>
    %c43 = arith.constant 43 : index
    %227 = memref.load %arg1[%c43] : memref<87xf32, #tpu.memory_space<smem>>
    %228 = vector.broadcast %227 : f32 to vector<1x128xf32>
    %229 = arith.mulf %228, %3 : vector<1x128xf32>
    %230 = arith.addf %226, %229 : vector<1x128xf32>
    %c44 = arith.constant 44 : index
    %231 = memref.load %arg1[%c44] : memref<87xf32, #tpu.memory_space<smem>>
    %232 = vector.broadcast %231 : f32 to vector<1x128xf32>
    %233 = arith.mulf %232, %4 : vector<1x128xf32>
    %234 = arith.addf %230, %233 : vector<1x128xf32>
    %c45 = arith.constant 45 : index
    %235 = memref.load %arg1[%c45] : memref<87xf32, #tpu.memory_space<smem>>
    %236 = vector.broadcast %235 : f32 to vector<1x128xf32>
    %237 = arith.mulf %236, %5 : vector<1x128xf32>
    %238 = arith.addf %234, %237 : vector<1x128xf32>
    %c46 = arith.constant 46 : index
    %239 = memref.load %arg1[%c46] : memref<87xf32, #tpu.memory_space<smem>>
    %240 = vector.broadcast %239 : f32 to vector<1x128xf32>
    %241 = arith.mulf %240, %6 : vector<1x128xf32>
    %242 = arith.addf %238, %241 : vector<1x128xf32>
    %c47 = arith.constant 47 : index
    %243 = memref.load %arg1[%c47] : memref<87xf32, #tpu.memory_space<smem>>
    %244 = vector.broadcast %243 : f32 to vector<1x128xf32>
    %245 = arith.mulf %244, %7 : vector<1x128xf32>
    %246 = arith.addf %242, %245 : vector<1x128xf32>
    %cst_30 = arith.constant 5.000000e-01 : f32
    %247 = vector.broadcast %cst_30 : f32 to vector<1x128xf32>
    %248 = arith.mulf %247, %246 : vector<1x128xf32>
    %249 = math.tanh %248 : vector<1x128xf32>
    %cst_31 = arith.constant 5.000000e-01 : f32
    %250 = vector.broadcast %cst_31 : f32 to vector<1x128xf32>
    %251 = arith.mulf %250, %249 : vector<1x128xf32>
    %cst_32 = arith.constant 5.000000e-01 : f32
    %252 = vector.broadcast %cst_32 : f32 to vector<1x128xf32>
    %253 = arith.addf %251, %252 : vector<1x128xf32>
    %c78 = arith.constant 78 : index
    %254 = memref.load %arg1[%c78] : memref<87xf32, #tpu.memory_space<smem>>
    %c54 = arith.constant 54 : index
    %255 = memref.load %arg1[%c54] : memref<87xf32, #tpu.memory_space<smem>>
    %256 = vector.broadcast %255 : f32 to vector<1x128xf32>
    %257 = arith.mulf %256, %48 : vector<1x128xf32>
    %258 = vector.broadcast %254 : f32 to vector<1x128xf32>
    %259 = arith.addf %258, %257 : vector<1x128xf32>
    %c55 = arith.constant 55 : index
    %260 = memref.load %arg1[%c55] : memref<87xf32, #tpu.memory_space<smem>>
    %261 = vector.broadcast %260 : f32 to vector<1x128xf32>
    %262 = arith.mulf %261, %89 : vector<1x128xf32>
    %263 = arith.addf %259, %262 : vector<1x128xf32>
    %c56 = arith.constant 56 : index
    %264 = memref.load %arg1[%c56] : memref<87xf32, #tpu.memory_space<smem>>
    %265 = vector.broadcast %264 : f32 to vector<1x128xf32>
    %266 = arith.mulf %265, %130 : vector<1x128xf32>
    %267 = arith.addf %263, %266 : vector<1x128xf32>
    %c57 = arith.constant 57 : index
    %268 = memref.load %arg1[%c57] : memref<87xf32, #tpu.memory_space<smem>>
    %269 = vector.broadcast %268 : f32 to vector<1x128xf32>
    %270 = arith.mulf %269, %171 : vector<1x128xf32>
    %271 = arith.addf %267, %270 : vector<1x128xf32>
    %c58 = arith.constant 58 : index
    %272 = memref.load %arg1[%c58] : memref<87xf32, #tpu.memory_space<smem>>
    %273 = vector.broadcast %272 : f32 to vector<1x128xf32>
    %274 = arith.mulf %273, %212 : vector<1x128xf32>
    %275 = arith.addf %271, %274 : vector<1x128xf32>
    %c59 = arith.constant 59 : index
    %276 = memref.load %arg1[%c59] : memref<87xf32, #tpu.memory_space<smem>>
    %277 = vector.broadcast %276 : f32 to vector<1x128xf32>
    %278 = arith.mulf %277, %253 : vector<1x128xf32>
    %279 = arith.addf %275, %278 : vector<1x128xf32>
    %cst_33 = arith.constant 5.000000e-01 : f32
    %280 = vector.broadcast %cst_33 : f32 to vector<1x128xf32>
    %281 = arith.mulf %280, %279 : vector<1x128xf32>
    %282 = math.tanh %281 : vector<1x128xf32>
    %cst_34 = arith.constant 5.000000e-01 : f32
    %283 = vector.broadcast %cst_34 : f32 to vector<1x128xf32>
    %284 = arith.mulf %283, %282 : vector<1x128xf32>
    %cst_35 = arith.constant 5.000000e-01 : f32
    %285 = vector.broadcast %cst_35 : f32 to vector<1x128xf32>
    %286 = arith.addf %284, %285 : vector<1x128xf32>
    %c79 = arith.constant 79 : index
    %287 = memref.load %arg1[%c79] : memref<87xf32, #tpu.memory_space<smem>>
    %c60 = arith.constant 60 : index
    %288 = memref.load %arg1[%c60] : memref<87xf32, #tpu.memory_space<smem>>
    %289 = vector.broadcast %288 : f32 to vector<1x128xf32>
    %290 = arith.mulf %289, %48 : vector<1x128xf32>
    %291 = vector.broadcast %287 : f32 to vector<1x128xf32>
    %292 = arith.addf %291, %290 : vector<1x128xf32>
    %c61 = arith.constant 61 : index
    %293 = memref.load %arg1[%c61] : memref<87xf32, #tpu.memory_space<smem>>
    %294 = vector.broadcast %293 : f32 to vector<1x128xf32>
    %295 = arith.mulf %294, %89 : vector<1x128xf32>
    %296 = arith.addf %292, %295 : vector<1x128xf32>
    %c62 = arith.constant 62 : index
    %297 = memref.load %arg1[%c62] : memref<87xf32, #tpu.memory_space<smem>>
    %298 = vector.broadcast %297 : f32 to vector<1x128xf32>
    %299 = arith.mulf %298, %130 : vector<1x128xf32>
    %300 = arith.addf %296, %299 : vector<1x128xf32>
    %c63 = arith.constant 63 : index
    %301 = memref.load %arg1[%c63] : memref<87xf32, #tpu.memory_space<smem>>
    %302 = vector.broadcast %301 : f32 to vector<1x128xf32>
    %303 = arith.mulf %302, %171 : vector<1x128xf32>
    %304 = arith.addf %300, %303 : vector<1x128xf32>
    %c64 = arith.constant 64 : index
    %305 = memref.load %arg1[%c64] : memref<87xf32, #tpu.memory_space<smem>>
    %306 = vector.broadcast %305 : f32 to vector<1x128xf32>
    %307 = arith.mulf %306, %212 : vector<1x128xf32>
    %308 = arith.addf %304, %307 : vector<1x128xf32>
    %c65 = arith.constant 65 : index
    %309 = memref.load %arg1[%c65] : memref<87xf32, #tpu.memory_space<smem>>
    %310 = vector.broadcast %309 : f32 to vector<1x128xf32>
    %311 = arith.mulf %310, %253 : vector<1x128xf32>
    %312 = arith.addf %308, %311 : vector<1x128xf32>
    %cst_36 = arith.constant 5.000000e-01 : f32
    %313 = vector.broadcast %cst_36 : f32 to vector<1x128xf32>
    %314 = arith.mulf %313, %312 : vector<1x128xf32>
    %315 = math.tanh %314 : vector<1x128xf32>
    %cst_37 = arith.constant 5.000000e-01 : f32
    %316 = vector.broadcast %cst_37 : f32 to vector<1x128xf32>
    %317 = arith.mulf %316, %315 : vector<1x128xf32>
    %cst_38 = arith.constant 5.000000e-01 : f32
    %318 = vector.broadcast %cst_38 : f32 to vector<1x128xf32>
    %319 = arith.addf %317, %318 : vector<1x128xf32>
    %c80 = arith.constant 80 : index
    %320 = memref.load %arg1[%c80] : memref<87xf32, #tpu.memory_space<smem>>
    %c66 = arith.constant 66 : index
    %321 = memref.load %arg1[%c66] : memref<87xf32, #tpu.memory_space<smem>>
    %322 = vector.broadcast %321 : f32 to vector<1x128xf32>
    %323 = arith.mulf %322, %48 : vector<1x128xf32>
    %324 = vector.broadcast %320 : f32 to vector<1x128xf32>
    %325 = arith.addf %324, %323 : vector<1x128xf32>
    %c67 = arith.constant 67 : index
    %326 = memref.load %arg1[%c67] : memref<87xf32, #tpu.memory_space<smem>>
    %327 = vector.broadcast %326 : f32 to vector<1x128xf32>
    %328 = arith.mulf %327, %89 : vector<1x128xf32>
    %329 = arith.addf %325, %328 : vector<1x128xf32>
    %c68 = arith.constant 68 : index
    %330 = memref.load %arg1[%c68] : memref<87xf32, #tpu.memory_space<smem>>
    %331 = vector.broadcast %330 : f32 to vector<1x128xf32>
    %332 = arith.mulf %331, %130 : vector<1x128xf32>
    %333 = arith.addf %329, %332 : vector<1x128xf32>
    %c69 = arith.constant 69 : index
    %334 = memref.load %arg1[%c69] : memref<87xf32, #tpu.memory_space<smem>>
    %335 = vector.broadcast %334 : f32 to vector<1x128xf32>
    %336 = arith.mulf %335, %171 : vector<1x128xf32>
    %337 = arith.addf %333, %336 : vector<1x128xf32>
    %c70 = arith.constant 70 : index
    %338 = memref.load %arg1[%c70] : memref<87xf32, #tpu.memory_space<smem>>
    %339 = vector.broadcast %338 : f32 to vector<1x128xf32>
    %340 = arith.mulf %339, %212 : vector<1x128xf32>
    %341 = arith.addf %337, %340 : vector<1x128xf32>
    %c71 = arith.constant 71 : index
    %342 = memref.load %arg1[%c71] : memref<87xf32, #tpu.memory_space<smem>>
    %343 = vector.broadcast %342 : f32 to vector<1x128xf32>
    %344 = arith.mulf %343, %253 : vector<1x128xf32>
    %345 = arith.addf %341, %344 : vector<1x128xf32>
    %cst_39 = arith.constant 5.000000e-01 : f32
    %346 = vector.broadcast %cst_39 : f32 to vector<1x128xf32>
    %347 = arith.mulf %346, %345 : vector<1x128xf32>
    %348 = math.tanh %347 : vector<1x128xf32>
    %cst_40 = arith.constant 5.000000e-01 : f32
    %349 = vector.broadcast %cst_40 : f32 to vector<1x128xf32>
    %350 = arith.mulf %349, %348 : vector<1x128xf32>
    %cst_41 = arith.constant 5.000000e-01 : f32
    %351 = vector.broadcast %cst_41 : f32 to vector<1x128xf32>
    %352 = arith.addf %350, %351 : vector<1x128xf32>
    %c81 = arith.constant 81 : index
    %353 = memref.load %arg1[%c81] : memref<87xf32, #tpu.memory_space<smem>>
    %c72 = arith.constant 72 : index
    %354 = memref.load %arg1[%c72] : memref<87xf32, #tpu.memory_space<smem>>
    %355 = vector.broadcast %354 : f32 to vector<1x128xf32>
    %356 = arith.mulf %355, %48 : vector<1x128xf32>
    %357 = vector.broadcast %353 : f32 to vector<1x128xf32>
    %358 = arith.addf %357, %356 : vector<1x128xf32>
    %c73 = arith.constant 73 : index
    %359 = memref.load %arg1[%c73] : memref<87xf32, #tpu.memory_space<smem>>
    %360 = vector.broadcast %359 : f32 to vector<1x128xf32>
    %361 = arith.mulf %360, %89 : vector<1x128xf32>
    %362 = arith.addf %358, %361 : vector<1x128xf32>
    %c74 = arith.constant 74 : index
    %363 = memref.load %arg1[%c74] : memref<87xf32, #tpu.memory_space<smem>>
    %364 = vector.broadcast %363 : f32 to vector<1x128xf32>
    %365 = arith.mulf %364, %130 : vector<1x128xf32>
    %366 = arith.addf %362, %365 : vector<1x128xf32>
    %c75 = arith.constant 75 : index
    %367 = memref.load %arg1[%c75] : memref<87xf32, #tpu.memory_space<smem>>
    %368 = vector.broadcast %367 : f32 to vector<1x128xf32>
    %369 = arith.mulf %368, %171 : vector<1x128xf32>
    %370 = arith.addf %366, %369 : vector<1x128xf32>
    %c76 = arith.constant 76 : index
    %371 = memref.load %arg1[%c76] : memref<87xf32, #tpu.memory_space<smem>>
    %372 = vector.broadcast %371 : f32 to vector<1x128xf32>
    %373 = arith.mulf %372, %212 : vector<1x128xf32>
    %374 = arith.addf %370, %373 : vector<1x128xf32>
    %c77 = arith.constant 77 : index
    %375 = memref.load %arg1[%c77] : memref<87xf32, #tpu.memory_space<smem>>
    %376 = vector.broadcast %375 : f32 to vector<1x128xf32>
    %377 = arith.mulf %376, %253 : vector<1x128xf32>
    %378 = arith.addf %374, %377 : vector<1x128xf32>
    %cst_42 = arith.constant 5.000000e-01 : f32
    %379 = vector.broadcast %cst_42 : f32 to vector<1x128xf32>
    %380 = arith.mulf %379, %378 : vector<1x128xf32>
    %381 = math.tanh %380 : vector<1x128xf32>
    %cst_43 = arith.constant 5.000000e-01 : f32
    %382 = vector.broadcast %cst_43 : f32 to vector<1x128xf32>
    %383 = arith.mulf %382, %381 : vector<1x128xf32>
    %cst_44 = arith.constant 5.000000e-01 : f32
    %384 = vector.broadcast %cst_44 : f32 to vector<1x128xf32>
    %385 = arith.addf %383, %384 : vector<1x128xf32>
    %c86 = arith.constant 86 : index
    %386 = memref.load %arg1[%c86] : memref<87xf32, #tpu.memory_space<smem>>
    %c82 = arith.constant 82 : index
    %387 = memref.load %arg1[%c82] : memref<87xf32, #tpu.memory_space<smem>>
    %388 = vector.broadcast %387 : f32 to vector<1x128xf32>
    %389 = arith.mulf %388, %286 : vector<1x128xf32>
    %390 = vector.broadcast %386 : f32 to vector<1x128xf32>
    %391 = arith.addf %390, %389 : vector<1x128xf32>
    %c83 = arith.constant 83 : index
    %392 = memref.load %arg1[%c83] : memref<87xf32, #tpu.memory_space<smem>>
    %393 = vector.broadcast %392 : f32 to vector<1x128xf32>
    %394 = arith.mulf %393, %319 : vector<1x128xf32>
    %395 = arith.addf %391, %394 : vector<1x128xf32>
    %c84 = arith.constant 84 : index
    %396 = memref.load %arg1[%c84] : memref<87xf32, #tpu.memory_space<smem>>
    %397 = vector.broadcast %396 : f32 to vector<1x128xf32>
    %398 = arith.mulf %397, %352 : vector<1x128xf32>
    %399 = arith.addf %395, %398 : vector<1x128xf32>
    %c85 = arith.constant 85 : index
    %400 = memref.load %arg1[%c85] : memref<87xf32, #tpu.memory_space<smem>>
    %401 = vector.broadcast %400 : f32 to vector<1x128xf32>
    %402 = arith.mulf %401, %385 : vector<1x128xf32>
    %403 = arith.addf %399, %402 : vector<1x128xf32>
    %cst_45 = arith.constant 5.000000e-01 : f32
    %404 = vector.broadcast %cst_45 : f32 to vector<1x128xf32>
    %405 = arith.mulf %404, %403 : vector<1x128xf32>
    %406 = math.tanh %405 : vector<1x128xf32>
    %cst_46 = arith.constant 5.000000e-01 : f32
    %407 = vector.broadcast %cst_46 : f32 to vector<1x128xf32>
    %408 = arith.mulf %407, %406 : vector<1x128xf32>
    %cst_47 = arith.constant 5.000000e-01 : f32
    %409 = vector.broadcast %cst_47 : f32 to vector<1x128xf32>
    %410 = arith.addf %408, %409 : vector<1x128xf32>
    %c0_48 = arith.constant 0 : index
    %c0_49 = arith.constant 0 : index
    %411 = vector.load %arg3[%c0_48, %c0_49] : memref<1x128xf32, #tpu.memory_space<vmem>>, vector<1x128xf32>
    tpu.vector_store %arg3[%c0_48, %c0_49], %410 {strides = array<i32>} : memref<1x128xf32, #tpu.memory_space<vmem>>, vector<1x128xf32>,
    return
  }
  func.func @transform_0(%arg0: i32) -> i32 {
    %c0_i32 = arith.constant 0 : i32
    %c0_i32_0 = arith.constant 0 : i32
    return %c0_i32 : i32
  }
  func.func @transform_1(%arg0: i32) -> (i32, i32) {
    %c0_i32 = arith.constant 0 : i32
    %c0_i32_0 = arith.constant 0 : i32
    return %c0_i32, %arg0 : i32, i32
  }
  func.func @transform_2(%arg0: i32) -> (i32, i32) {
    %c0_i32 = arith.constant 0 : i32
    %c0_i32_0 = arith.constant 0 : i32
    return %c0_i32, %arg0 : i32, i32
  }
}

</mosaic_0001>

<llo_original>
// kernel: tpu_custom_call.1
$region0: #{tpu_custom_call.1}
  #allocation0 [shape = 'u32[]', space=smem, size = 0x4, offset = 0x4, fixed_abs, tag = 'smem constant byte address 0x4 - core index']
  #allocation1 [shape = 'u32[144,128]{1,0:T(1,128)}', space=vmem, size = 0x12000, scoped, tag = 'internal scratch']
  %s0 = inlined_call_operand.hbm [shape: f32[87], index: 0, kind: input, shape index: {}]
  %s1 = inlined_call_operand.hbm [shape: f32[8,128], index: 1, kind: input, shape index: {}]
  %s2 = inlined_call_operand.hbm [shape: f32[1,128], index: 2, kind: output, shape index: {}]
  %s3 = sld [smem:[#allocation0]]
  $region26: #{tpu_custom_call.1} parent=0
    _
  %s5 = ssub.s32 1, %s3
  %s6 = scalar_select 0, %s5, %s3
  $region1: #{tpu_custom_call.1} parent=0
    #allocation2 [shape = 'u8[512]{0}', space=smem, size = 0x200, scoped, tag = 'input window, operand 0, single buffered']
    #allocation3 [shape = 's32[1]{0}', space=sflag, size = 0x4, scoped, tag = 'scoped memory for tpu_custom_call.1']
    #allocation4 [shape = 's32[1]{0}', space=sflag, size = 0x4, scoped, tag = 'scoped memory for tpu_custom_call.1']
    #allocation5 [shape = 's32[1]{0}', space=sflag, size = 0x4, scoped, tag = 'scoped memory for tpu_custom_call.1']
    #allocation6 [shape = 'u8[4096]{0}', space=vmem, size = 0x1000, scoped, tag = 'input window, operand 1, single buffered']
    #allocation7 [shape = 'u8[512]{0}', space=vmem, size = 0x400, scoped, tag = 'output window, operand 0, single buffered']
    %7 = vsyncpa [#allocation5], 0
    %8 = vsyncpa [#allocation3], 0
    %9 = vsyncpa [#allocation4], 0
    // Predicated region
    $region2: #{tpu_custom_call.1} parent=1 // pred_check
      _
    $region3: #{tpu_custom_call.1} parent=1 // pred_check_branch
      %11 = sbr.rel (0) target = $region5
    $region4: #{tpu_custom_call.1} parent=1 // pred_region
      %s13 = ssub.s32 16, 16
      %14 = vsyncadd [#allocation5], %s13
      %17 = dma.hbm_to_smem %s0, 16, [#allocation2], [#allocation5]
    $region5: #{tpu_custom_call.1} parent=1 // pred_fallthru
      _
    // Predicated region
    $region6: #{tpu_custom_call.1} parent=1 // pred_check
      _
    $region7: #{tpu_custom_call.1} parent=1 // pred_check_branch
      %19 = sbr.rel (0) target = $region9
    $region8: #{tpu_custom_call.1} parent=1 // pred_region
      %s21 = ssub.s32 128, 128
      %22 = vsyncadd [#allocation3], %s21
      %s24 = sshll.u32 [#allocation6], 4
      %s25 = int_to_ptr.vmem [resolvable:$true] %s24
      %27 = dma.hbm_to_vmem [thread:$0]  %s1, 128, %s25, [#allocation3]
    $region9: #{tpu_custom_call.1} parent=1 // pred_fallthru
      _
    // Predicated region
    $region10: #{tpu_custom_call.1} parent=1 // pred_check
      _
    $region11: #{tpu_custom_call.1} parent=1 // pred_check_branch
      %29 = sbr.rel (0) target = $region13
    $region12: #{tpu_custom_call.1} parent=1 // pred_region
      %30 = dma.done [#allocation5], 16
    $region13: #{tpu_custom_call.1} parent=1 // pred_fallthru
      _
    // Predicated region
    $region14: #{tpu_custom_call.1} parent=1 // pred_check
      _
    $region15: #{tpu_custom_call.1} parent=1 // pred_check_branch
      %32 = sbr.rel (0) target = $region17
    $region16: #{tpu_custom_call.1} parent=1 // pred_region
      %33 = dma.done [#allocation3], 128
    $region17: #{tpu_custom_call.1} parent=1 // pred_fallthru
      _
    %34 = sfence
    %v35 = vld [vmem:[#allocation6] sm:$0x1]
    %v36 = vld [vmem:[#allocation6 + $0x1] sm:$0x1]
    %v37 = vld [vmem:[#allocation6 + $0x2] sm:$0x1]
    %v38 = vld [vmem:[#allocation6 + $0x3] sm:$0x1]
    %v39 = vld [vmem:[#allocation6 + $0x4] sm:$0x1]
    %v40 = vld [vmem:[#allocation6 + $0x5] sm:$0x1]
    %v41 = vld [vmem:[#allocation6 + $0x6] sm:$0x1]
    %v42 = vld [vmem:[#allocation6 + $0x7] sm:$0x1]
    %s43 = sld [smem:[#allocation2 + $0x30]]
    %s44 = sld [smem:[#allocation2]]
    %v45 = vstv %s44
    %v46 = vmul.f32 %v45, %v35
    %v47 = vstv %s43
    %v48 = vadd.f32 %v47, %v46
    %s49 = sld [smem:[#allocation2 + $0x1]]
    %v50 = vstv %s49
    %v51 = vmul.f32 %v50, %v36
    %v52 = vadd.f32 %v48, %v51
    %s53 = sld [smem:[#allocation2 + $0x2]]
    %v54 = vstv %s53
    %v55 = vmul.f32 %v54, %v37
    %v56 = vadd.f32 %v52, %v55
    %s57 = sld [smem:[#allocation2 + $0x3]]
    %v58 = vstv %s57
    %v59 = vmul.f32 %v58, %v38
    %v60 = vadd.f32 %v56, %v59
    %s61 = sld [smem:[#allocation2 + $0x4]]
    %v62 = vstv %s61
    %v63 = vmul.f32 %v62, %v39
    %v64 = vadd.f32 %v60, %v63
    %s65 = sld [smem:[#allocation2 + $0x5]]
    %v66 = vstv %s65
    %v67 = vmul.f32 %v66, %v40
    %v68 = vadd.f32 %v64, %v67
    %s69 = sld [smem:[#allocation2 + $0x6]]
    %v70 = vstv %s69
    %v71 = vmul.f32 %v70, %v41
    %v72 = vadd.f32 %v68, %v71
    %s73 = sld [smem:[#allocation2 + $0x7]]
    %v74 = vstv %s73
    %v75 = vmul.f32 %v74, %v42
    %v76 = vadd.f32 %v72, %v75
    %v77 = vmul.f32 %v76, 0.5
    %v78 = vtanh.pop %v77
    %v79 = vmul.f32 %v78, 0.5
    %v80 = vadd.f32 %v79, 0.5
    %s81 = sld [smem:[#allocation2 + $0x31]]
    %s82 = sld [smem:[#allocation2 + $0x8]]
    %v83 = vstv %s82
    %v84 = vmul.f32 %v83, %v35
    %v85 = vstv %s81
    %v86 = vadd.f32 %v85, %v84
    %s87 = sld [smem:[#allocation2 + $0x9]]
    %v88 = vstv %s87
    %v89 = vmul.f32 %v88, %v36
    %v90 = vadd.f32 %v86, %v89
    %s91 = sld [smem:[#allocation2 + $0xa]]
    %v92 = vstv %s91
    %v93 = vmul.f32 %v92, %v37
    %v94 = vadd.f32 %v90, %v93
    %s95 = sld [smem:[#allocation2 + $0xb]]
    %v96 = vstv %s95
    %v97 = vmul.f32 %v96, %v38
    %v98 = vadd.f32 %v94, %v97
    %s99 = sld [smem:[#allocation2 + $0xc]]
    %v100 = vstv %s99
    %v101 = vmul.f32 %v100, %v39
    %v102 = vadd.f32 %v98, %v101
    %s103 = sld [smem:[#allocation2 + $0xd]]
    %v104 = vstv %s103
    %v105 = vmul.f32 %v104, %v40
    %v106 = vadd.f32 %v102, %v105
    %s107 = sld [smem:[#allocation2 + $0xe]]
    %v108 = vstv %s107
    %v109 = vmul.f32 %v108, %v41
    %v110 = vadd.f32 %v106, %v109
    %s111 = sld [smem:[#allocation2 + $0xf]]
    %v112 = vstv %s111
    %v113 = vmul.f32 %v112, %v42
    %v114 = vadd.f32 %v110, %v113
    %v115 = vmul.f32 %v114, 0.5
    %v116 = vtanh.pop %v115
    %v117 = vmul.f32 %v116, 0.5
    %v118 = vadd.f32 %v117, 0.5
    %s119 = sld [smem:[#allocation2 + $0x32]]
    %s120 = sld [smem:[#allocation2 + $0x10]]
    %v121 = vstv %s120
    %v122 = vmul.f32 %v121, %v35
    %v123 = vstv %s119
    %v124 = vadd.f32 %v123, %v122
    %s125 = sld [smem:[#allocation2 + $0x11]]
    %v126 = vstv %s125
    %v127 = vmul.f32 %v126, %v36
    %v128 = vadd.f32 %v124, %v127
    %s129 = sld [smem:[#allocation2 + $0x12]]
    %v130 = vstv %s129
    %v131 = vmul.f32 %v130, %v37
    %v132 = vadd.f32 %v128, %v131
    %s133 = sld [smem:[#allocation2 + $0x13]]
    %v134 = vstv %s133
    %v135 = vmul.f32 %v134, %v38
    %v136 = vadd.f32 %v132, %v135
    %s137 = sld [smem:[#allocation2 + $0x14]]
    %v138 = vstv %s137
    %v139 = vmul.f32 %v138, %v39
    %v140 = vadd.f32 %v136, %v139
    %s141 = sld [smem:[#allocation2 + $0x15]]
    %v142 = vstv %s141
    %v143 = vmul.f32 %v142, %v40
    %v144 = vadd.f32 %v140, %v143
    %s145 = sld [smem:[#allocation2 + $0x16]]
    %v146 = vstv %s145
    %v147 = vmul.f32 %v146, %v41
    %v148 = vadd.f32 %v144, %v147
    %s149 = sld [smem:[#allocation2 + $0x17]]
    %v150 = vstv %s149
    %v151 = vmul.f32 %v150, %v42
    %v152 = vadd.f32 %v148, %v151
    %v153 = vmul.f32 %v152, 0.5
    %v154 = vtanh.pop %v153
    %v155 = vmul.f32 %v154, 0.5
    %v156 = vadd.f32 %v155, 0.5
    %s157 = sld [smem:[#allocation2 + $0x33]]
    %s158 = sld [smem:[#allocation2 + $0x18]]
    %v159 = vstv %s158
    %v160 = vmul.f32 %v159, %v35
    %v161 = vstv %s157
    %v162 = vadd.f32 %v161, %v160
    %s163 = sld [smem:[#allocation2 + $0x19]]
    %v164 = vstv %s163
    %v165 = vmul.f32 %v164, %v36
    %v166 = vadd.f32 %v162, %v165
    %s167 = sld [smem:[#allocation2 + $0x1a]]
    %v168 = vstv %s167
    %v169 = vmul.f32 %v168, %v37
    %v170 = vadd.f32 %v166, %v169
    %s171 = sld [smem:[#allocation2 + $0x1b]]
    %v172 = vstv %s171
    %v173 = vmul.f32 %v172, %v38
    %v174 = vadd.f32 %v170, %v173
    %s175 = sld [smem:[#allocation2 + $0x1c]]
    %v176 = vstv %s175
    %v177 = vmul.f32 %v176, %v39
    %v178 = vadd.f32 %v174, %v177
    %s179 = sld [smem:[#allocation2 + $0x1d]]
    %v180 = vstv %s179
    %v181 = vmul.f32 %v180, %v40
    %v182 = vadd.f32 %v178, %v181
    %s183 = sld [smem:[#allocation2 + $0x1e]]
    %v184 = vstv %s183
    %v185 = vmul.f32 %v184, %v41
    %v186 = vadd.f32 %v182, %v185
    %s187 = sld [smem:[#allocation2 + $0x1f]]
    %v188 = vstv %s187
    %v189 = vmul.f32 %v188, %v42
    %v190 = vadd.f32 %v186, %v189
    %v191 = vmul.f32 %v190, 0.5
    %v192 = vtanh.pop %v191
    %v193 = vmul.f32 %v192, 0.5
    %v194 = vadd.f32 %v193, 0.5
    %s195 = sld [smem:[#allocation2 + $0x34]]
    %s196 = sld [smem:[#allocation2 + $0x20]]
    %v197 = vstv %s196
    %v198 = vmul.f32 %v197, %v35
    %v199 = vstv %s195
    %v200 = vadd.f32 %v199, %v198
    %s201 = sld [smem:[#allocation2 + $0x21]]
    %v202 = vstv %s201
    %v203 = vmul.f32 %v202, %v36
    %v204 = vadd.f32 %v200, %v203
    %s205 = sld [smem:[#allocation2 + $0x22]]
    %v206 = vstv %s205
    %v207 = vmul.f32 %v206, %v37
    %v208 = vadd.f32 %v204, %v207
    %s209 = sld [smem:[#allocation2 + $0x23]]
    %v210 = vstv %s209
    %v211 = vmul.f32 %v210, %v38
    %v212 = vadd.f32 %v208, %v211
    %s213 = sld [smem:[#allocation2 + $0x24]]
    %v214 = vstv %s213
    %v215 = vmul.f32 %v214, %v39
    %v216 = vadd.f32 %v212, %v215
    %s217 = sld [smem:[#allocation2 + $0x25]]
    %v218 = vstv %s217
    %v219 = vmul.f32 %v218, %v40
    %v220 = vadd.f32 %v216, %v219
    %s221 = sld [smem:[#allocation2 + $0x26]]
    %v222 = vstv %s221
    %v223 = vmul.f32 %v222, %v41
    %v224 = vadd.f32 %v220, %v223
    %s225 = sld [smem:[#allocation2 + $0x27]]
    %v226 = vstv %s225
    %v227 = vmul.f32 %v226, %v42
    %v228 = vadd.f32 %v224, %v227
    %v229 = vmul.f32 %v228, 0.5
    %v230 = vtanh.pop %v229
    %v231 = vmul.f32 %v230, 0.5
    %v232 = vadd.f32 %v231, 0.5
    %s233 = sld [smem:[#allocation2 + $0x35]]
    %s234 = sld [smem:[#allocation2 + $0x28]]
    %v235 = vstv %s234
    %v236 = vmul.f32 %v235, %v35
    %v237 = vstv %s233
    %v238 = vadd.f32 %v237, %v236
    %s239 = sld [smem:[#allocation2 + $0x29]]
    %v240 = vstv %s239
    %v241 = vmul.f32 %v240, %v36
    %v242 = vadd.f32 %v238, %v241
    %s243 = sld [smem:[#allocation2 + $0x2a]]
    %v244 = vstv %s243
    %v245 = vmul.f32 %v244, %v37
    %v246 = vadd.f32 %v242, %v245
    %s247 = sld [smem:[#allocation2 + $0x2b]]
    %v248 = vstv %s247
    %v249 = vmul.f32 %v248, %v38
    %v250 = vadd.f32 %v246, %v249
    %s251 = sld [smem:[#allocation2 + $0x2c]]
    %v252 = vstv %s251
    %v253 = vmul.f32 %v252, %v39
    %v254 = vadd.f32 %v250, %v253
    %s255 = sld [smem:[#allocation2 + $0x2d]]
    %v256 = vstv %s255
    %v257 = vmul.f32 %v256, %v40
    %v258 = vadd.f32 %v254, %v257
    %s259 = sld [smem:[#allocation2 + $0x2e]]
    %v260 = vstv %s259
    %v261 = vmul.f32 %v260, %v41
    %v262 = vadd.f32 %v258, %v261
    %s263 = sld [smem:[#allocation2 + $0x2f]]
    %v264 = vstv %s263
    %v265 = vmul.f32 %v264, %v42
    %v266 = vadd.f32 %v262, %v265
    %v267 = vmul.f32 %v266, 0.5
    %v268 = vtanh.pop %v267
    %v269 = vmul.f32 %v268, 0.5
    %v270 = vadd.f32 %v269, 0.5
    %s271 = sld [smem:[#allocation2 + $0x4e]]
    %s272 = sld [smem:[#allocation2 + $0x36]]
    %v273 = vstv %s272
    %v274 = vmul.f32 %v273, %v80
    %v275 = vstv %s271
    %v276 = vadd.f32 %v275, %v274
    %s277 = sld [smem:[#allocation2 + $0x37]]
    %v278 = vstv %s277
    %v279 = vmul.f32 %v278, %v118
    %v280 = vadd.f32 %v276, %v279
    %s281 = sld [smem:[#allocation2 + $0x38]]
    %v282 = vstv %s281
    %v283 = vmul.f32 %v282, %v156
    %v284 = vadd.f32 %v280, %v283
    %s285 = sld [smem:[#allocation2 + $0x39]]
    %v286 = vstv %s285
    %v287 = vmul.f32 %v286, %v194
    %v288 = vadd.f32 %v284, %v287
    %s289 = sld [smem:[#allocation2 + $0x3a]]
    %v290 = vstv %s289
    %v291 = vmul.f32 %v290, %v232
    %v292 = vadd.f32 %v288, %v291
    %s293 = sld [smem:[#allocation2 + $0x3b]]
    %v294 = vstv %s293
    %v295 = vmul.f32 %v294, %v270
    %v296 = vadd.f32 %v292, %v295
    %v297 = vmul.f32 %v296, 0.5
    %v298 = vtanh.pop %v297
    %v299 = vmul.f32 %v298, 0.5
    %v300 = vadd.f32 %v299, 0.5
    %s301 = sld [smem:[#allocation2 + $0x4f]]
    %s302 = sld [smem:[#allocation2 + $0x3c]]
    %v303 = vstv %s302
    %v304 = vmul.f32 %v303, %v80
    %v305 = vstv %s301
    %v306 = vadd.f32 %v305, %v304
    %s307 = sld [smem:[#allocation2 + $0x3d]]
    %v308 = vstv %s307
    %v309 = vmul.f32 %v308, %v118
    %v310 = vadd.f32 %v306, %v309
    %s311 = sld [smem:[#allocation2 + $0x3e]]
    %v312 = vstv %s311
    %v313 = vmul.f32 %v312, %v156
    %v314 = vadd.f32 %v310, %v313
    %s315 = sld [smem:[#allocation2 + $0x3f]]
    %v316 = vstv %s315
    %v317 = vmul.f32 %v316, %v194
    %v318 = vadd.f32 %v314, %v317
    %s319 = sld [smem:[#allocation2 + $0x40]]
    %v320 = vstv %s319
    %v321 = vmul.f32 %v320, %v232
    %v322 = vadd.f32 %v318, %v321
    %s323 = sld [smem:[#allocation2 + $0x41]]
    %v324 = vstv %s323
    %v325 = vmul.f32 %v324, %v270
    %v326 = vadd.f32 %v322, %v325
    %v327 = vmul.f32 %v326, 0.5
    %v328 = vtanh.pop %v327
    %v329 = vmul.f32 %v328, 0.5
    %v330 = vadd.f32 %v329, 0.5
    %s331 = sld [smem:[#allocation2 + $0x50]]
    %s332 = sld [smem:[#allocation2 + $0x42]]
    %v333 = vstv %s332
    %v334 = vmul.f32 %v333, %v80
    %v335 = vstv %s331
    %v336 = vadd.f32 %v335, %v334
    %s337 = sld [smem:[#allocation2 + $0x43]]
    %v338 = vstv %s337
    %v339 = vmul.f32 %v338, %v118
    %v340 = vadd.f32 %v336, %v339
    %s341 = sld [smem:[#allocation2 + $0x44]]
    %v342 = vstv %s341
    %v343 = vmul.f32 %v342, %v156
    %v344 = vadd.f32 %v340, %v343
    %s345 = sld [smem:[#allocation2 + $0x45]]
    %v346 = vstv %s345
    %v347 = vmul.f32 %v346, %v194
    %v348 = vadd.f32 %v344, %v347
    %s349 = sld [smem:[#allocation2 + $0x46]]
    %v350 = vstv %s349
    %v351 = vmul.f32 %v350, %v232
    %v352 = vadd.f32 %v348, %v351
    %s353 = sld [smem:[#allocation2 + $0x47]]
    %v354 = vstv %s353
    %v355 = vmul.f32 %v354, %v270
    %v356 = vadd.f32 %v352, %v355
    %v357 = vmul.f32 %v356, 0.5
    %v358 = vtanh.pop %v357
    %v359 = vmul.f32 %v358, 0.5
    %v360 = vadd.f32 %v359, 0.5
    %s361 = sld [smem:[#allocation2 + $0x51]]
    %s362 = sld [smem:[#allocation2 + $0x48]]
    %v363 = vstv %s362
    %v364 = vmul.f32 %v363, %v80
    %v365 = vstv %s361
    %v366 = vadd.f32 %v365, %v364
    %s367 = sld [smem:[#allocation2 + $0x49]]
    %v368 = vstv %s367
    %v369 = vmul.f32 %v368, %v118
    %v370 = vadd.f32 %v366, %v369
    %s371 = sld [smem:[#allocation2 + $0x4a]]
    %v372 = vstv %s371
    %v373 = vmul.f32 %v372, %v156
    %v374 = vadd.f32 %v370, %v373
    %s375 = sld [smem:[#allocation2 + $0x4b]]
    %v376 = vstv %s375
    %v377 = vmul.f32 %v376, %v194
    %v378 = vadd.f32 %v374, %v377
    %s379 = sld [smem:[#allocation2 + $0x4c]]
    %v380 = vstv %s379
    %v381 = vmul.f32 %v380, %v232
    %v382 = vadd.f32 %v378, %v381
    %s383 = sld [smem:[#allocation2 + $0x4d]]
    %v384 = vstv %s383
    %v385 = vmul.f32 %v384, %v270
    %v386 = vadd.f32 %v382, %v385
    %v387 = vmul.f32 %v386, 0.5
    %v388 = vtanh.pop %v387
    %v389 = vmul.f32 %v388, 0.5
    %v390 = vadd.f32 %v389, 0.5
    %s391 = sld [smem:[#allocation2 + $0x56]]
    %s392 = sld [smem:[#allocation2 + $0x52]]
    %v393 = vstv %s392
    %v394 = vmul.f32 %v393, %v300
    %v395 = vstv %s391
    %v396 = vadd.f32 %v395, %v394
    %s397 = sld [smem:[#allocation2 + $0x53]]
    %v398 = vstv %s397
    %v399 = vmul.f32 %v398, %v330
    %v400 = vadd.f32 %v396, %v399
    %s401 = sld [smem:[#allocation2 + $0x54]]
    %v402 = vstv %s401
    %v403 = vmul.f32 %v402, %v360
    %v404 = vadd.f32 %v400, %v403
    %s405 = sld [smem:[#allocation2 + $0x55]]
    %v406 = vstv %s405
    %v407 = vmul.f32 %v406, %v390
    %v408 = vadd.f32 %v404, %v407
    %v409 = vmul.f32 %v408, 0.5
    %v410 = vtanh.pop %v409
    %v411 = vmul.f32 %v410, 0.5
    %v412 = vadd.f32 %v411, 0.5
    %413 = vst [vmem:[#allocation7] sm:$0x1] %v412
    // Predicated region
    $region18: #{tpu_custom_call.1} parent=1 // pred_check
      _
    $region19: #{tpu_custom_call.1} parent=1 // pred_check_branch
      %415 = sbr.rel (0) target = $region21
    $region20: #{tpu_custom_call.1} parent=1 // pred_region
      %s417 = ssub.s32 16, 16
      %418 = vsyncadd [#allocation4], %s417
      %s420 = sshll.u32 [#allocation7], 4
      %s421 = int_to_ptr.vmem [resolvable:$true] %s420
      %423 = dma.vmem_to_hbm [thread:$0]  %s421, 16, %s2, [#allocation4]
    $region21: #{tpu_custom_call.1} parent=1 // pred_fallthru
      _
    // Predicated region
    $region22: #{tpu_custom_call.1} parent=1 // pred_check
      _
    $region23: #{tpu_custom_call.1} parent=1 // pred_check_branch
      %425 = sbr.rel (0) target = $region25
    $region24: #{tpu_custom_call.1} parent=1 // pred_region
      %426 = dma.done [#allocation4], 16
    $region25: #{tpu_custom_call.1} parent=1 // pred_fallthru
      _
    %427 = vsyncpa [#allocation3], 1
    %428 = vsyncpa [#allocation4], 1
    %429 = vsyncpa [#allocation5], 1

</llo_original>
